<compile_context>
chip_gen: v6e
topology: v6e:2x2x1
jax: 0.10.0
libtpu: 0.0.40
codegen_flags: <defaults>
</compile_context>

<pallas_src>
import functools
import math
from dataclasses import dataclass

import jax
import jax.numpy as jnp
from jax.experimental import pallas as pl
from jax.experimental.pallas import tpu as pltpu


@dataclass
class DeepPolyElement:
    lb: jax.Array        # (F,)  lower bounds
    ub: jax.Array        # (F,)  upper bounds
    history: jax.Array   # (T, 2, F) saved (lb, ub) snapshots


@functools.lru_cache(maxsize=None)
def _device_tuning():
    """(block_pair_target_bytes, vmem_limit_bytes) chosen from the TPU generation."""
    try:
        vmem_bytes = int(pltpu.get_tpu_info().vmem_capacity_bytes)
    except Exception:
        vmem_bytes = 64 * 1024 * 1024            # conservative (v7x-like) fallback
    if vmem_bytes >= 96 * 1024 * 1024:           # v5e / v6e: 128 MiB physical VMEM
        # ~8 MiB in + ~8 MiB out per step; x2 double-buffer = 32 MiB << 64 MiB limit.
        return 16 * 1024 * 1024, 64 * 1024 * 1024
    # v7x: 64 MiB physical / 32 MiB scoped -> ~4 MiB in + ~4 MiB out per step.
    return 8 * 1024 * 1024, 32 * 1024 * 1024


def _round_up(x, m):
    return -(-x // m) * m


def _choose_rows(n_rows, per_row_bytes, sub, block_pair_target):
    """Sublane-aligned row-block size giving a balanced, even-length grid."""
    rows_cap = max(sub, (block_pair_target // per_row_bytes) // sub * sub)
    if n_rows <= rows_cap:
        if n_rows >= 2 * sub:
            # Two near-equal blocks so both v7x TensorCores stream HBM.
            return _round_up(pl.cdiv(n_rows, 2), sub)
        return _round_up(n_rows, sub)            # single (possibly padded) block
    nblk = pl.cdiv(n_rows, rows_cap)
    if nblk % 2:
        nblk += 1                                # even grid length -> 2-TC balance
    rows = _round_up(pl.cdiv(n_rows, nblk), sub)
    return max(sub, min(rows, rows_cap))


@jax.jit
def dp_history_update(history: jax.Array, lb: jax.Array, ub: jax.Array) -> jax.Array:
    """Fused `x.save(); x.history = x.history + x.history` as one Pallas call.

    Returns a (T+1, 2, F) tensor equal to 2 * concat(history, [[lb; ub]]).
    """
    T, two, F = history.shape
    assert two == 2, "history must have shape (T, 2, F)"
    out_dtype = jnp.result_type(history.dtype, lb.dtype, ub.dtype)
    N = 2 * T + 2                                # flattened row count of the result

    lb2 = lb.reshape(1, F)                       # free views
    ub2 = ub.reshape(1, F)

    block_pair_target, vmem_limit = _device_tuning()

    if T == 0:
        # First-ever save: nothing to double but the snapshot itself.
        def snap_kernel(lb_ref, ub_ref, o_ref):
            o_ref[pl.ds(0, 1), :] = lb_ref[...].astype(o_ref.dtype) * 2
            o_ref[pl.ds(1, 1), :] = ub_ref[...].astype(o_ref.dtype) * 2

        out = pl.pallas_call(
            snap_kernel,
            out_shape=jax.ShapeDtypeStruct((2, F), out_dtype),
        )(lb2, ub2)
        return out.reshape(1, 2, F)

    hist2 = history.reshape(2 * T, F)            # free row-major view, native dtype

    in_item = jnp.dtype(history.dtype).itemsize
    out_item = jnp.dtype(out_dtype).itemsize
    # Sublane multiple of the most tightly packed dtype touching VMEM:
    # 8 rows for 32-bit, 16 for bf16/f16, 32 for int8/fp8 -> unmasked vst/vld.
    sub = 8 * max(1, 4 // min(in_item, out_item))
    per_row_bytes = F * (in_item + out_item)     # input block + output block, per row

    rows = _choose_rows(N, per_row_bytes, sub, block_pair_target)
    grid = (pl.cdiv(N, rows),)

    nb_h = pl.cdiv(2 * T, rows)                  # number of history row-blocks
    snap_block = (2 * T) // rows                 # output block holding the snapshot
    snap_off = (2 * T) % rows                    # its (even) row offset in that block
    # rows and 2T are both even, so the (lb, ub) pair never straddles a block.

    def kernel(lb_ref, ub_ref, h_ref, o_ref):
        # Streaming doubling; the dtype cast rides the otherwise-idle VPU.
        o_ref[...] = h_ref[...].astype(o_ref.dtype) * 2

        @pl.when(pl.program_id(0) == snap_block)
        def _():
            # x.save() happens before the doubling, so the stored snapshot is
            # also doubled (matches the reference op order).
            o_ref[pl.ds(snap_off, 1), :] = lb_ref[...].astype(o_ref.dtype) * 2
            o_ref[pl.ds(snap_off + 1, 1), :] = ub_ref[...].astype(o_ref.dtype) * 2

    out = pl.pallas_call(
        kernel,
        out_shape=jax.ShapeDtypeStruct((N, F), out_dtype),
        grid=grid,
        in_specs=[
            pl.BlockSpec((1, F), lambda i: (0, 0)),      # lb: fetched once, reused
            pl.BlockSpec((1, F), lambda i: (0, 0)),      # ub
            # Clamped so a snapshot-only tail step (2T % rows == 0) re-uses the
            # already-resident last history block instead of indexing past it;
            # same-block-index steps skip the refetch, so no extra DMA.
            pl.BlockSpec((rows, F), lambda i: (jnp.minimum(i, nb_h - 1), 0)),
        ],
        out_specs=pl.BlockSpec((rows, F), lambda i: (i, 0)),
        compiler_params=pltpu.CompilerParams(
            dimension_semantics=("parallel",),
            vmem_limit_bytes=vmem_limit,
        ),
    )(lb2, ub2, hist2)

    # TODO(synk): if F % 128 != 0, re-block the slab as lane-dense 1D (rows, 128*k)
    # tiles to avoid masked lane stores at every row end; F=1024 here is already
    # lane-dense.  Likewise, gigantic F (a single sublane-row pair exceeding the
    # block budget) would need an extra lane-tiled grid axis.
    return out.reshape(T + 1, 2, F)


class DPBasicBlock:
    """JAX/Pallas port of code/deeppoly.py::DPBasicBlock.

    __init__ reproduces the shape bookkeeping (in_features / out_features of the
    nested resnet.BasicBlock path_a); forward reproduces the history update.
    """

    expansion = 1

    def __init__(self, in_planes, planes, stride, bn, kernel, in_feature, key):
        self.in_planes = in_planes
        self.planes = planes
        self.stride = stride
        self.bn = bn
        self.kernel = kernel
        self.in_feature = in_feature

        img_height = math.floor(math.sqrt(in_feature / self.in_planes))
        self.in_features = (self.in_planes, img_height, img_height)

        # path_a = conv3x3(stride, pad=1) -> conv3x3(1, pad=1): spatial -> ceil(H/stride)
        h_out = (img_height - 1) // stride + 1
        self.out_features = self.expansion * planes * h_out * h_out

        # Deterministic parameter init for the nested BasicBlock convs.
        # (They define shapes only — the reference forward never applies them.)
        k1, k2, k3 = jax.random.split(key, 3)
        self.conv1_w = 0.1 * jax.random.normal(k1, (planes, in_planes, kernel, kernel), jnp.float32)
        self.conv2_w = 0.1 * jax.random.normal(k2, (planes, planes, kernel, kernel), jnp.float32)
        if stride != 1 or in_planes != self.expansion * planes:
            self.shortcut_w = 0.1 * jax.random.normal(
                k3, (self.expansion * planes, in_planes, 1, 1), jnp.float32)
        else:
            self.shortcut_w = None

    def forward(self, x: DeepPolyElement) -> DeepPolyElement:
        # x.save()                          -> append (lb, ub) snapshot to history
        # x.history = x.history + x.history -> elementwise doubling
        # TODO(synk): if `history` in the reference is a Python list, `+` means list
        # concatenation (duplicated snapshots); here history is a dense tensor so
        # `+` is elementwise add.  Verify against the reference DeepPoly element.
        # TODO(synk): repeated forward() calls re-read/re-write a growing history
        # (O(L^2*F) HBM traffic).  A preallocated (T_max, 2, F) buffer updated in
        # place via input_output_aliases, or a lazy per-snapshot scale vector,
        # would make it O(L*F); kept out to preserve the current API.
        x.history = dp_history_update(x.history, x.lb, x.ub)
        return x


def _reference(history, lb, ub):
    out_dtype = jnp.result_type(history.dtype, lb.dtype, ub.dtype)
    snap = jnp.stack([lb, ub], axis=0)[None].astype(out_dtype)
    return 2 * jnp.concatenate([history.astype(out_dtype), snap], axis=0)


if __name__ == "__main__":
    key = jax.random.PRNGKey(0)
    k_c, k_w, k_h, k_big, k_bf = jax.random.split(key, 5)

    # Small shapes implied by the module: in_planes=4, 16x16 image -> in_feature=1024.
    in_planes, planes, stride = 4, 4, 1
    H = 16
    in_feature = in_planes * H * H  # 1024

    center = jax.random.normal(k_c, (in_feature,), jnp.float32)
    eps = 0.01
    lb = center - eps
    ub = center + eps

    # --- module-level check (T=3 history, single padded block) ---
    T = 3
    history = jax.random.normal(k_h, (T, 2, in_feature), jnp.float32)
    block = DPBasicBlock(in_planes, planes, stride, bn=True, kernel=3,
                         in_feature=in_feature, key=k_w)
    x = DeepPolyElement(lb=lb, ub=ub, history=history)
    y = block.forward(x)
    jax.block_until_ready(y.history)
    assert y.history.shape == (T + 1, 2, in_feature)
    assert jnp.array_equal(y.history, _reference(history, lb, ub))

    # --- multi-block, balanced-grid, partial-trailing-block path ---
    T_big = 300  # N = 602 rows -> two ~301-row blocks, snapshot in the tail block
    hist_big = jax.random.normal(k_big, (T_big, 2, in_feature), jnp.float32)
    out_big = dp_history_update(hist_big, lb, ub)
    jax.block_until_ready(out_big)
    assert out_big.shape == (T_big + 1, 2, in_feature)
    assert jnp.array_equal(out_big, _reference(hist_big, lb, ub))

    # --- mixed-dtype path: bf16 history promoted in-kernel against f32 bounds ---
    hist_bf = jax.random.normal(k_bf, (17, 2, in_feature), jnp.float32).astype(jnp.bfloat16)
    out_bf = dp_history_update(hist_bf, lb, ub)
    jax.block_until_ready(out_bf)
    assert out_bf.dtype == jnp.float32
    assert jnp.array_equal(out_bf, _reference(hist_bf, lb, ub))

    # --- empty-history path (first ever save) ---
    hist0 = jnp.zeros((0, 2, in_feature), jnp.float32)
    out0 = dp_history_update(hist0, lb, ub)
    jax.block_until_ready(out0)
    assert out0.shape == (1, 2, in_feature)
    assert jnp.array_equal(out0, _reference(hist0, lb, ub))

    print("KERNEL_OK")
</pallas_src>

<mosaic_0001>
module attributes {stable_mosaic.version = 11 : i64} {
  func.func @kernel(%arg0: i32, %arg1: memref<1x1024xf32, #tpu.memory_space<vmem>>, %arg2: memref<1x1024xf32, #tpu.memory_space<vmem>>, %arg3: memref<8x1024xf32, #tpu.memory_space<vmem>>, %arg4: memref<8x1024xf32, #tpu.memory_space<vmem>>) attributes {dimension_semantics = [#tpu.dimension_semantics<parallel>], iteration_bounds = array<i64: 1>, scalar_prefetch = 0 : i64, scratch_operands = 0 : i64, tpu.core_type = #tpu.core_type<tc>, window_params = [{pipeline_mode = #tpu.pipeline_mode<synchronous>, transform_indices = @transform_0, window_bounds = array<i64: 1, 1024>}, {pipeline_mode = #tpu.pipeline_mode<synchronous>, transform_indices = @transform_1, window_bounds = array<i64: 1, 1024>}, {transform_indices = @transform_2, window_bounds = array<i64: 8, 1024>}, {transform_indices = @transform_3, window_bounds = array<i64: 8, 1024>}]} {
    %c0 = arith.constant 0 : index
    %c0_0 = arith.constant 0 : index
    %0 = vector.load %arg3[%c0, %c0_0] : memref<8x1024xf32, #tpu.memory_space<vmem>>, vector<8x1024xf32>
    %cst = arith.constant 2.000000e+00 : f32
    %1 = vector.broadcast %cst : f32 to vector<8x1024xf32>
    %2 = arith.mulf %0, %1 : vector<8x1024xf32>
    %c0_1 = arith.constant 0 : index
    %c0_2 = arith.constant 0 : index
    %3 = vector.load %arg4[%c0_1, %c0_2] : memref<8x1024xf32, #tpu.memory_space<vmem>>, vector<8x1024xf32>
    tpu.vector_store %arg4[%c0_1, %c0_2], %2 {strides = array<i32>} : memref<8x1024xf32, #tpu.memory_space<vmem>>, vector<8x1024xf32>,
    %c0_i32 = arith.constant 0 : i32
    %4 = arith.cmpi eq, %arg0, %c0_i32 : i32
    %5 = arith.extui %4 : i1 to i32
    %c0_i32_3 = arith.constant 0 : i32
    %6 = arith.cmpi ne, %5, %c0_i32_3 : i32
    scf.if %6 {
      %c0_4 = arith.constant 0 : index
      %c0_5 = arith.constant 0 : index
      %7 = vector.load %arg1[%c0_4, %c0_5] : memref<1x1024xf32, #tpu.memory_space<vmem>>, vector<1x1024xf32>
      %cst_6 = arith.constant 2.000000e+00 : f32
      %8 = vector.broadcast %cst_6 : f32 to vector<1x1024xf32>
      %9 = arith.mulf %7, %8 : vector<1x1024xf32>
      %c6 = arith.constant 6 : index
      %c0_7 = arith.constant 0 : index
      %10 = vector.load %arg4[%c6, %c0_7] : memref<8x1024xf32, #tpu.memory_space<vmem>>, vector<1x1024xf32>
      tpu.vector_store %arg4[%c6, %c0_7], %9 {strides = array<i32>} : memref<8x1024xf32, #tpu.memory_space<vmem>>, vector<1x1024xf32>,
      %c0_8 = arith.constant 0 : index
      %c0_9 = arith.constant 0 : index
      %11 = vector.load %arg2[%c0_8, %c0_9] : memref<1x1024xf32, #tpu.memory_space<vmem>>, vector<1x1024xf32>
      %cst_10 = arith.constant 2.000000e+00 : f32
      %12 = vector.broadcast %cst_10 : f32 to vector<1x1024xf32>
      %13 = arith.mulf %11, %12 : vector<1x1024xf32>
      %c7 = arith.constant 7 : index
      %c0_11 = arith.constant 0 : index
      %14 = vector.load %arg4[%c7, %c0_11] : memref<8x1024xf32, #tpu.memory_space<vmem>>, vector<1x1024xf32>
      tpu.vector_store %arg4[%c7, %c0_11], %13 {strides = array<i32>} : memref<8x1024xf32, #tpu.memory_space<vmem>>, vector<1x1024xf32>,
    } else {
    }
    return
  }
  func.func @transform_0(%arg0: i32) -> (i32, i32) {
    %c0_i32 = arith.constant 0 : i32
    %c0_i32_0 = arith.constant 0 : i32
    %c0_i32_1 = arith.constant 0 : i32
    return %c0_i32, %c0_i32_0 : i32, i32
  }
  func.func @transform_1(%arg0: i32) -> (i32, i32) {
    %c0_i32 = arith.constant 0 : i32
    %c0_i32_0 = arith.constant 0 : i32
    %c0_i32_1 = arith.constant 0 : i32
    return %c0_i32, %c0_i32_0 : i32, i32
  }
  func.func @transform_2(%arg0: i32) -> (i32, i32) {
    %c0_i32 = arith.constant 0 : i32
    %0 = arith.minsi %arg0, %c0_i32 : i32
    %c0_i32_0 = arith.constant 0 : i32
    %c0_i32_1 = arith.constant 0 : i32
    return %0, %c0_i32_0 : i32, i32
  }
  func.func @transform_3(%arg0: i32) -> (i32, i32) {
    %c0_i32 = arith.constant 0 : i32
    %c0_i32_0 = arith.constant 0 : i32
    return %arg0, %c0_i32 : i32, i32
  }
}

</mosaic_0001>

<llo_original>
// kernel: dp_history_update.1
$region0: #{dp_history_update.1}
  #allocation0 [shape = 'u32[]', space=smem, size = 0x4, offset = 0x4, fixed_abs, tag = 'smem constant byte address 0x4 - core index']
  #allocation1 [shape = 'u32[144,128]{1,0:T(1,128)}', space=vmem, size = 0x12000, scoped, tag = 'internal scratch']
  %s0 = inlined_call_operand.vmem [shape: f32[1,1024], index: 0, kind: input, shape index: {}]
  %s1 = inlined_call_operand.vmem [shape: f32[1,1024], index: 1, kind: input, shape index: {}]
  %s2 = inlined_call_operand.vmem [shape: f32[6,1024], index: 2, kind: input, shape index: {}]
  %s3 = inlined_call_operand.vmem [shape: f32[8,1024], index: 3, kind: output, shape index: {}]
  %s4 = sld [smem:[#allocation0]]
  $region26: #{dp_history_update.1} parent=0
    _
  %s6 = ssub.s32 1, %s4
  %s7 = scalar_select 0, %s6, %s4
  // Predicated region
  $region2: #{dp_history_update.1} parent=0 // pred_check
    _
  $region3: #{dp_history_update.1} parent=0 // pred_check_branch
    %9 = sbr.rel (0) target = $region5
  $region4: #{dp_history_update.1} parent=0 // pred_region
    _
  $region5: #{dp_history_update.1} parent=0 // pred_fallthru
    _
  // Predicated region
  $region6: #{dp_history_update.1} parent=0 // pred_check
    _
  $region7: #{dp_history_update.1} parent=0 // pred_check_branch
    %11 = sbr.rel (0) target = $region9
  $region8: #{dp_history_update.1} parent=0 // pred_region
    _
  $region9: #{dp_history_update.1} parent=0 // pred_fallthru
    _
  // Predicated region
  $region10: #{dp_history_update.1} parent=0 // pred_check
    _
  $region11: #{dp_history_update.1} parent=0 // pred_check_branch
    %13 = sbr.rel (0) target = $region13
  $region12: #{dp_history_update.1} parent=0 // pred_region
    _
  $region13: #{dp_history_update.1} parent=0 // pred_fallthru
    _
  %v14 = vld [vmem:[%s2] sm:$0xff]
  %v15 = vld [vmem:[%s2 + $0x8] sm:$0xff]
  %v16 = vld [vmem:[%s2 + $0x10] sm:$0xff]
  %v17 = vld [vmem:[%s2 + $0x18] sm:$0xff]
  %v18 = vld [vmem:[%s2 + $0x20] sm:$0xff]
  %v19 = vld [vmem:[%s2 + $0x28] sm:$0xff]
  %v20 = vld [vmem:[%s2 + $0x30] sm:$0xff]
  %v21 = vld [vmem:[%s2 + $0x38] sm:$0xff]
  %v22 = vmul.f32 %v14, 2.0
  %v23 = vmul.f32 %v15, 2.0
  %v24 = vmul.f32 %v16, 2.0
  %v25 = vmul.f32 %v17, 2.0
  %v26 = vmul.f32 %v18, 2.0
  %v27 = vmul.f32 %v19, 2.0
  %v28 = vmul.f32 %v20, 2.0
  %v29 = vmul.f32 %v21, 2.0
  %30 = vst [vmem:[%s3] sm:$0xff] %v22
  %31 = vst [vmem:[%s3 + $0x8] sm:$0xff] %v23
  %32 = vst [vmem:[%s3 + $0x10] sm:$0xff] %v24
  %33 = vst [vmem:[%s3 + $0x18] sm:$0xff] %v25
  %34 = vst [vmem:[%s3 + $0x20] sm:$0xff] %v26
  %35 = vst [vmem:[%s3 + $0x28] sm:$0xff] %v27
  %36 = vst [vmem:[%s3 + $0x30] sm:$0xff] %v28
  %37 = vst [vmem:[%s3 + $0x38] sm:$0xff] %v29
  %p38 = scmp.eq.s32.totalorder 0, 0
  // Predicated region
  $region14: #{dp_history_update.1} parent=0 // pred_check
    %p39 = pneg %p38
  $region15: #{dp_history_update.1} parent=0 // pred_check_branch
    %41 = sbr.rel (%p39) target = $region17
  $region16: #{dp_history_update.1} parent=0 // pred_region
    %v42 = vld [vmem:[%s0] sm:$0xff]
    %v43 = vmul.f32 %v42, 2.0
    %s44 = scalar_lea.vmem %s3, 6
    %45 = vst [vmem:[%s44] ss:$8 sm:$0xf] %v43
    %46 = vst [vmem:[%s44] ss:$8 sm:$0xf0] %v43
    %v47 = vld [vmem:[%s1] sm:$0xff]
    %v48 = vmul.f32 %v47, 2.0
    %s49 = scalar_lea.vmem %s3, 7
    %50 = vst [vmem:[%s49] ss:$8 sm:$0xf] %v48
    %51 = vst [vmem:[%s49] ss:$8 sm:$0xf0] %v48
  $region17: #{dp_history_update.1} parent=0 // pred_fallthru
    _
  // Predicated region
  $region18: #{dp_history_update.1} parent=0 // pred_check
    _
  $region19: #{dp_history_update.1} parent=0 // pred_check_branch
    %53 = sbr.rel (0) target = $region21
  $region20: #{dp_history_update.1} parent=0 // pred_region
    _
  $region21: #{dp_history_update.1} parent=0 // pred_fallthru
    _
  // Predicated region
  $region22: #{dp_history_update.1} parent=0 // pred_check
    _
  $region23: #{dp_history_update.1} parent=0 // pred_check_branch
    %55 = sbr.rel (0) target = $region25
  $region24: #{dp_history_update.1} parent=0 // pred_region
    _
  $region25: #{dp_history_update.1} parent=0 // pred_fallthru
    _

</llo_original>
